<compile_context>
chip_gen: v7x
topology: tpu7x:2x2x1
jax: 0.10.0
libtpu: 0.0.40
codegen_flags: <defaults>
</compile_context>

<pallas_src>
import functools
import math

import jax
import jax.numpy as jnp
from jax.experimental import pallas as pl
from jax.experimental.pallas import tpu as pltpu


# ---------------------------------------------------------------------------
# Device-aware configuration
# ---------------------------------------------------------------------------
def _round_up(x, m):
    return ((x + m - 1) // m) * m


def _lcm(a, b):
    return a * b // math.gcd(a, b)


@functools.lru_cache(maxsize=None)
def _tpu_config():
    """Returns (vmem_ceiling_bytes, two_cores)."""
    kind = ""
    try:
        kind = jax.devices()[0].device_kind.lower()
    except Exception:
        pass
    two_cores = "7" in kind  # v7x has 2 TensorCores per chip
    vmem_cap = None
    try:
        info = pltpu.get_tpu_info()
        vmem_cap = int(getattr(info, "vmem_capacity_bytes", 0)) or None
    except Exception:
        vmem_cap = None
    if vmem_cap is None:
        vmem_cap = (64 << 20) if two_cores else (128 << 20)
    ceiling = max(16 << 20, min((3 * vmem_cap) // 4, 96 << 20))
    return ceiling, two_cores


def _target_block_bytes(itemsize, ceiling):
    # in+out double-buffered (4*B) + ~5 f32-sized temporaries + headroom <= ceiling
    f32_mult = 4 // max(1, itemsize)
    b = (ceiling - (8 << 20)) // (4 + 5 * f32_mult)
    return int(max(1 << 20, min(b, 8 << 20)))


def _vmem_limit(block_bytes, param_bytes, itemsize, ceiling):
    f32_block = block_bytes * 4 // max(1, itemsize)
    need = 4 * block_bytes + 5 * f32_block + 8 * param_bytes + (4 << 20)
    return int(min(max(need, 8 << 20), ceiling))


# ---------------------------------------------------------------------------
# Kernels
# ---------------------------------------------------------------------------
def _ln_last_kernel(x_ref, w_ref, b_ref, o_ref, *, eps):
    # x_ref: (br, C); w_ref/b_ref: (1, C). Normalize over the last axis.
    x = x_ref[...].astype(jnp.float32)
    w = w_ref[...].astype(jnp.float32)
    b = b_ref[...].astype(jnp.float32)
    mean = jnp.mean(x, axis=-1, keepdims=True)
    ex2 = jnp.mean(x * x, axis=-1, keepdims=True)
    var = jnp.maximum(ex2 - mean * mean, 0.0)
    inv = jax.lax.rsqrt(var + eps)
    xn = (x - mean) * inv
    o_ref[...] = (xn * w + b).astype(o_ref.dtype)


def _ln_last_packed_kernel(x_ref, w_ref, b_ref, seg_ref, segt_ref, o_ref, *,
                           eps, inv_c):
    # x_ref: (br, g*C) with g rows packed per lane-dense row.
    # seg_ref: (g*C, g) 0/1 segment-sum matrix; segt_ref: (g, g*C) its transpose.
    x = x_ref[...].astype(jnp.float32)
    w = w_ref[...].astype(jnp.float32)
    b = b_ref[...].astype(jnp.float32)
    seg = seg_ref[...]
    seg_t = segt_ref[...]
    # per-(row, segment) statistics via segment-sum matmuls (MXU is otherwise idle)
    mean = jnp.dot(x, seg, preferred_element_type=jnp.float32) * inv_c      # (br, g)
    ex2 = jnp.dot(x * x, seg, preferred_element_type=jnp.float32) * inv_c   # (br, g)
    var = jnp.maximum(ex2 - mean * mean, 0.0)
    inv = jax.lax.rsqrt(var + eps)
    mean_f = jnp.dot(mean, seg_t, preferred_element_type=jnp.float32)       # (br, g*C)
    inv_f = jnp.dot(inv, seg_t, preferred_element_type=jnp.float32)         # (br, g*C)
    xn = (x - mean_f) * inv_f
    o_ref[...] = (xn * w + b).astype(o_ref.dtype)


def _ln_first_kernel(x_ref, w_ref, b_ref, o_ref, *, eps):
    # x_ref: (1, C, T); w_ref/b_ref: (1, C, 1). Normalize over the C (sublane)
    # axis; the spatial tile T sits on the 128-lane axis -> lane-dense stores.
    x = x_ref[...].astype(jnp.float32)
    w = w_ref[...].astype(jnp.float32)
    b = b_ref[...].astype(jnp.float32)
    mean = jnp.mean(x, axis=1, keepdims=True)
    ex2 = jnp.mean(x * x, axis=1, keepdims=True)
    var = jnp.maximum(ex2 - mean * mean, 0.0)
    inv = jax.lax.rsqrt(var + eps)
    xn = (x - mean) * inv
    o_ref[...] = (xn * w + b).astype(o_ref.dtype)


# ---------------------------------------------------------------------------
# Block sizing
# ---------------------------------------------------------------------------
def _pick_block_rows(rows, width, itemsize, target_bytes, two_cores):
    if rows <= 8:
        return rows
    br = target_bytes // max(1, width * itemsize)
    br = max(8, (br // 8) * 8)
    if br >= rows:
        if two_cores and rows > 16:
            # v7x only: split once so both TensorCores get work
            return _round_up(pl.cdiv(rows, 2), 8)
        return rows                      # full-extent block (single-TC chips)
    if two_cores:
        steps = pl.cdiv(rows, br)
        if steps % 2 == 1:
            # keep the parallel step count even so the two TCs stay balanced
            br = max(8, _round_up(pl.cdiv(rows, steps + 1), 8))
    return br


def _pick_spatial_tile(hw, c, itemsize, n, target_bytes, two_cores):
    if hw <= 128:
        return hw                        # full extent (legal even if < 128)
    t = target_bytes // max(1, c * itemsize)
    t = max(128, (t // 128) * 128)
    hw_dense = (hw // 128) * 128         # keep main tiles unmasked (128-lane mult.)
    t = min(t, hw_dense)
    if two_cores:
        steps = pl.cdiv(hw, t)
        if (n * steps) % 2 == 1 and hw >= 256:
            # balance the two TensorCores by splitting the spatial axis, not N
            t = max(128, _round_up(pl.cdiv(hw, steps + 1), 128))
    return t


# ---------------------------------------------------------------------------
# Wrappers
# ---------------------------------------------------------------------------
def _layer_norm_channels_last(x, weight, bias, eps):
    orig_shape = x.shape
    c = orig_shape[-1]
    ceiling, two_cores = _tpu_config()
    x2 = x.reshape(-1, c)
    rows = x2.shape[0]
    itemsize = x2.dtype.itemsize
    target = _target_block_bytes(itemsize, ceiling)

    # --- lane packing: make the output slab lane-dense when C % 128 != 0 ---
    g = 1
    if c % 128 != 0:
        g0 = _lcm(c, 128) // c
        if rows % g0 == 0 and g0 * c <= 1024:
            g = g0

    if g > 1:
        gc = g * c
        rows_p = rows // g
        xp = x2.reshape(rows_p, gc)                       # free row-major view
        wp = jnp.tile(weight.reshape(-1), g).reshape(1, gc)
        bp = jnp.tile(bias.reshape(-1), g).reshape(1, gc)
        lane = jnp.arange(gc, dtype=jnp.int32)
        segm = (lane[:, None] // c ==
                jnp.arange(g, dtype=jnp.int32)[None, :]).astype(jnp.float32)
        segm_t = segm.T
        br = _pick_block_rows(rows_p, gc, itemsize, target, two_cores)
        grid = (pl.cdiv(rows_p, br),)
        block_bytes = br * gc * itemsize
        param_bytes = (2 * gc + 2 * gc * g) * 4
        kernel = functools.partial(_ln_last_packed_kernel, eps=eps, inv_c=1.0 / c)
        yp = pl.pallas_call(
            kernel,
            out_shape=jax.ShapeDtypeStruct((rows_p, gc), x2.dtype),
            grid_spec=pltpu.PrefetchScalarGridSpec(
                num_scalar_prefetch=0,
                grid=grid,
                in_specs=[
                    pl.BlockSpec((br, gc), lambda i: (i, 0)),
                    pl.BlockSpec((1, gc), lambda i: (0, 0)),
                    pl.BlockSpec((1, gc), lambda i: (0, 0)),
                    pl.BlockSpec((gc, g), lambda i: (0, 0)),
                    pl.BlockSpec((g, gc), lambda i: (0, 0)),
                ],
                out_specs=pl.BlockSpec((br, gc), lambda i: (i, 0)),
            ),
            compiler_params=pltpu.CompilerParams(
                dimension_semantics=("parallel",),
                vmem_limit_bytes=_vmem_limit(block_bytes, param_bytes, itemsize,
                                             ceiling),
            ),
        )(xp, wp, bp, segm, segm_t)
        return yp.reshape(orig_shape)

    # --- unpacked path (C multiple of 128, or packing not applicable) ---
    br = _pick_block_rows(rows, c, itemsize, target, two_cores)
    grid = (pl.cdiv(rows, br),)
    w2 = weight.reshape(1, c)
    b2 = bias.reshape(1, c)
    kernel = functools.partial(_ln_last_kernel, eps=eps)
    block_bytes = br * c * itemsize
    y2 = pl.pallas_call(
        kernel,
        out_shape=jax.ShapeDtypeStruct((rows, c), x2.dtype),
        grid_spec=pltpu.PrefetchScalarGridSpec(
            num_scalar_prefetch=0,
            grid=grid,
            in_specs=[
                pl.BlockSpec((br, c), lambda i: (i, 0)),
                pl.BlockSpec((1, c), lambda i: (0, 0)),
                pl.BlockSpec((1, c), lambda i: (0, 0)),
            ],
            out_specs=pl.BlockSpec((br, c), lambda i: (i, 0)),
        ),
        compiler_params=pltpu.CompilerParams(
            dimension_semantics=("parallel",),
            vmem_limit_bytes=_vmem_limit(block_bytes, 2 * c * 4, itemsize, ceiling),
        ),
    )(x2, w2, b2)
    return y2.reshape(orig_shape)


def _layer_norm_channels_first(x, weight, bias, eps):
    n, c, h, w = x.shape
    hw = h * w
    ceiling, two_cores = _tpu_config()
    x3 = x.reshape(n, c, hw)                     # free reshape, no transpose
    itemsize = x3.dtype.itemsize
    target = _target_block_bytes(itemsize, ceiling)
    t = _pick_spatial_tile(hw, c, itemsize, n, target, two_cores)
    grid = (n, pl.cdiv(hw, t))
    w3 = weight.reshape(1, c, 1)
    b3 = bias.reshape(1, c, 1)
    kernel = functools.partial(_ln_first_kernel, eps=eps)
    block_bytes = c * t * itemsize
    y3 = pl.pallas_call(
        kernel,
        out_shape=jax.ShapeDtypeStruct((n, c, hw), x3.dtype),
        grid_spec=pltpu.PrefetchScalarGridSpec(
            num_scalar_prefetch=0,
            grid=grid,
            in_specs=[
                pl.BlockSpec((1, c, t), lambda i, j: (i, 0, j)),
                pl.BlockSpec((1, c, 1), lambda i, j: (0, 0, 0)),
                pl.BlockSpec((1, c, 1), lambda i, j: (0, 0, 0)),
            ],
            out_specs=pl.BlockSpec((1, c, t), lambda i, j: (i, 0, j)),
        ),
        compiler_params=pltpu.CompilerParams(
            dimension_semantics=("parallel", "parallel"),
            vmem_limit_bytes=_vmem_limit(block_bytes, 2 * c * 4, itemsize, ceiling),
        ),
    )(x3, w3, b3)
    return y3.reshape(n, c, h, w)


def layer_norm(x, weight, bias, eps=1e-6, data_format="channels_last"):
    """ConvNeXt-style LayerNorm.

    channels_last : x is (..., C); normalize over C (last axis).
    channels_first: x is (N, C, H, W); normalize over C (dim 1), no transposes.
    """
    if data_format not in ("channels_last", "channels_first"):
        raise NotImplementedError
    if data_format == "channels_last":
        return _layer_norm_channels_last(x, weight, bias, eps)
    return _layer_norm_channels_first(x, weight, bias, eps)


# ---------------------------------------------------------------------------
# Reference + demo
# ---------------------------------------------------------------------------
def _reference(x, weight, bias, eps, data_format):
    if data_format == "channels_last":
        mean = jnp.mean(x, axis=-1, keepdims=True)
        var = jnp.mean((x - mean) ** 2, axis=-1, keepdims=True)
        return (x - mean) / jnp.sqrt(var + eps) * weight + bias
    else:
        mean = jnp.mean(x, axis=1, keepdims=True)
        var = jnp.mean((x - mean) ** 2, axis=1, keepdims=True)
        xn = (x - mean) / jnp.sqrt(var + eps)
        return weight[None, :, None, None] * xn + bias[None, :, None, None]


if __name__ == "__main__":
    key = jax.random.PRNGKey(0)
    k1, k2, k3, k4, k5, k6, k7, k8 = jax.random.split(key, 8)
    eps = 1e-6

    # --- main demo, matching the nn.Module init (ones / zeros), C = 4 ---
    C = 4
    weight = jnp.ones((C,), dtype=jnp.float32)
    bias = jnp.zeros((C,), dtype=jnp.float32)

    # channels_first: (N, C, H, W) = (2, 4, 16, 16)
    x_cf = jax.random.normal(k1, (2, C, 16, 16), dtype=jnp.float32)
    y_cf = layer_norm(x_cf, weight, bias, eps=eps, data_format="channels_first")
    jax.block_until_ready(y_cf)
    assert jnp.allclose(y_cf, _reference(x_cf, weight, bias, eps, "channels_first"),
                        atol=1e-5, rtol=1e-5)

    # channels_last: (N, H, W, C) = (2, 16, 16, 4)  -> packed path, g = 32
    x_cl = jax.random.normal(k2, (2, 16, 16, C), dtype=jnp.float32)
    y_cl = layer_norm(x_cl, weight, bias, eps=eps, data_format="channels_last")
    jax.block_until_ready(y_cl)
    assert jnp.allclose(y_cl, _reference(x_cl, weight, bias, eps, "channels_last"),
                        atol=1e-4, rtol=1e-4)

    # --- realistic ConvNeXt channel counts / random affine params ---
    C2 = 96                                   # packed path, g = 4 (ConvNeXt stem dim)
    w2 = jax.random.normal(k3, (C2,), dtype=jnp.float32)
    b2 = jax.random.normal(k4, (C2,), dtype=jnp.float32)
    x2 = jax.random.normal(k5, (2, 8, 8, C2), dtype=jnp.float32)
    y2 = layer_norm(x2, w2, b2, eps=eps, data_format="channels_last")
    jax.block_until_ready(y2)
    assert jnp.allclose(y2, _reference(x2, w2, b2, eps, "channels_last"),
                        atol=1e-4, rtol=1e-4)

    C3 = 128                                  # lane-dense unpacked path
    w3 = jax.random.normal(k6, (C3,), dtype=jnp.float32)
    b3 = jax.random.normal(k7, (C3,), dtype=jnp.float32)
    x3 = jax.random.normal(k8, (2, 8, 8, C3), dtype=jnp.float32)
    y3 = layer_norm(x3, w3, b3, eps=eps, data_format="channels_last")
    jax.block_until_ready(y3)
    assert jnp.allclose(y3, _reference(x3, w3, b3, eps, "channels_last"),
                        atol=1e-4, rtol=1e-4)

    C4 = 96                                   # channels_first with realistic C
    w4 = jnp.ones((C4,), dtype=jnp.float32)
    b4 = jnp.zeros((C4,), dtype=jnp.float32)
    x4 = jax.random.normal(k1, (2, C4, 16, 16), dtype=jnp.float32)
    y4 = layer_norm(x4, w4, b4, eps=eps, data_format="channels_first")
    jax.block_until_ready(y4)
    assert jnp.allclose(y4, _reference(x4, w4, b4, eps, "channels_first"),
                        atol=1e-4, rtol=1e-4)

    print("KERNEL_OK")
</pallas_src>

<mosaic_0001>
module attributes {stable_mosaic.version = 11 : i64} {
  func.func @_ln_first_kernel(%arg0: i32, %arg1: i32, %arg2: memref<1x4x256xf32, #tpu.memory_space<vmem>>, %arg3: memref<1x4x1xf32, #tpu.memory_space<vmem>>, %arg4: memref<1x4x1xf32, #tpu.memory_space<vmem>>, %arg5: memref<1x4x256xf32, #tpu.memory_space<vmem>>) attributes {dimension_semantics = [#tpu.dimension_semantics<parallel>, #tpu.dimension_semantics<parallel>], iteration_bounds = array<i64: 2, 1>, scalar_prefetch = 0 : i64, scratch_operands = 0 : i64, tpu.core_type = #tpu.core_type<tc>, window_params = [{transform_indices = @transform_0, window_bounds = array<i64: 1, 4, 256>}, {pipeline_mode = #tpu.pipeline_mode<synchronous>, transform_indices = @transform_1, window_bounds = array<i64: 1, 4, 1>}, {pipeline_mode = #tpu.pipeline_mode<synchronous>, transform_indices = @transform_2, window_bounds = array<i64: 1, 4, 1>}, {transform_indices = @transform_3, window_bounds = array<i64: 1, 4, 256>}]} {
    %c0 = arith.constant 0 : index
    %c0_0 = arith.constant 0 : index
    %c0_1 = arith.constant 0 : index
    %0 = vector.load %arg2[%c0, %c0_0, %c0_1] : memref<1x4x256xf32, #tpu.memory_space<vmem>>, vector<1x4x256xf32>
    %c0_2 = arith.constant 0 : index
    %c0_3 = arith.constant 0 : index
    %c0_4 = arith.constant 0 : index
    %1 = vector.load %arg3[%c0_2, %c0_3, %c0_4] : memref<1x4x1xf32, #tpu.memory_space<vmem>>, vector<1x4x1xf32>
    %c0_5 = arith.constant 0 : index
    %c0_6 = arith.constant 0 : index
    %c0_7 = arith.constant 0 : index
    %2 = vector.load %arg4[%c0_5, %c0_6, %c0_7] : memref<1x4x1xf32, #tpu.memory_space<vmem>>, vector<1x4x1xf32>
    %cst = arith.constant dense<0.000000e+00> : vector<1x256xf32>
    %3 = vector.multi_reduction <add>, %0, %cst [1] : vector<1x4x256xf32> to vector<1x256xf32>
    %4 = vector.shape_cast %3 : vector<1x256xf32> to vector<1x1x256xf32>
    %cst_8 = arith.constant 4.000000e+00 : f32
    %5 = vector.broadcast %cst_8 : f32 to vector<1x1x256xf32>
    %6 = arith.divf %4, %5 : vector<1x1x256xf32>
    %7 = arith.mulf %0, %0 : vector<1x4x256xf32>
    %cst_9 = arith.constant dense<0.000000e+00> : vector<1x256xf32>
    %8 = vector.multi_reduction <add>, %7, %cst_9 [1] : vector<1x4x256xf32> to vector<1x256xf32>
    %9 = vector.shape_cast %8 : vector<1x256xf32> to vector<1x1x256xf32>
    %cst_10 = arith.constant 4.000000e+00 : f32
    %10 = vector.broadcast %cst_10 : f32 to vector<1x1x256xf32>
    %11 = arith.divf %9, %10 : vector<1x1x256xf32>
    %12 = arith.mulf %6, %6 : vector<1x1x256xf32>
    %13 = arith.subf %11, %12 : vector<1x1x256xf32>
    %cst_11 = arith.constant 0.000000e+00 : f32
    %14 = vector.broadcast %cst_11 : f32 to vector<1x1x256xf32>
    %15 = arith.maximumf %13, %14 : vector<1x1x256xf32>
    %cst_12 = arith.constant 9.99999997E-7 : f32
    %16 = vector.broadcast %cst_12 : f32 to vector<1x1x256xf32>
    %17 = arith.addf %15, %16 : vector<1x1x256xf32>
    %18 = math.rsqrt %17 : vector<1x1x256xf32>
    %19 = vector.broadcast %6 : vector<1x1x256xf32> to vector<1x4x256xf32>
    %20 = arith.subf %0, %19 : vector<1x4x256xf32>
    %21 = vector.broadcast %18 : vector<1x1x256xf32> to vector<1x4x256xf32>
    %22 = arith.mulf %20, %21 : vector<1x4x256xf32>
    %23 = vector.broadcast %1 : vector<1x4x1xf32> to vector<1x4x256xf32>
    %24 = arith.mulf %22, %23 : vector<1x4x256xf32>
    %25 = vector.broadcast %2 : vector<1x4x1xf32> to vector<1x4x256xf32>
    %26 = arith.addf %24, %25 : vector<1x4x256xf32>
    %c0_13 = arith.constant 0 : index
    %c0_14 = arith.constant 0 : index
    %c0_15 = arith.constant 0 : index
    %27 = vector.load %arg5[%c0_13, %c0_14, %c0_15] : memref<1x4x256xf32, #tpu.memory_space<vmem>>, vector<1x4x256xf32>
    tpu.vector_store %arg5[%c0_13, %c0_14, %c0_15], %26 {strides = array<i32>} : memref<1x4x256xf32, #tpu.memory_space<vmem>>, vector<1x4x256xf32>,
    return
  }
  func.func @transform_0(%arg0: i32, %arg1: i32) -> (i32, i32, i32) {
    %c0_i32 = arith.constant 0 : i32
    %c0_i32_0 = arith.constant 0 : i32
    return %arg0, %c0_i32, %arg1 : i32, i32, i32
  }
  func.func @transform_1(%arg0: i32, %arg1: i32) -> (i32, i32, i32) {
    %c0_i32 = arith.constant 0 : i32
    %c0_i32_0 = arith.constant 0 : i32
    %c0_i32_1 = arith.constant 0 : i32
    %c0_i32_2 = arith.constant 0 : i32
    return %c0_i32, %c0_i32_0, %c0_i32_1 : i32, i32, i32
  }
  func.func @transform_2(%arg0: i32, %arg1: i32) -> (i32, i32, i32) {
    %c0_i32 = arith.constant 0 : i32
    %c0_i32_0 = arith.constant 0 : i32
    %c0_i32_1 = arith.constant 0 : i32
    %c0_i32_2 = arith.constant 0 : i32
    return %c0_i32, %c0_i32_0, %c0_i32_1 : i32, i32, i32
  }
  func.func @transform_3(%arg0: i32, %arg1: i32) -> (i32, i32, i32) {
    %c0_i32 = arith.constant 0 : i32
    %c0_i32_0 = arith.constant 0 : i32
    return %arg0, %c0_i32, %arg1 : i32, i32, i32
  }
}

</mosaic_0001>

<llo_original>
// kernel: tpu_custom_call.1
$region0: #{tpu_custom_call.1}
  #allocation0 [shape = 'u32[]', space=smem, size = 0x4, offset = 0x4, fixed_abs, tag = 'smem constant byte address 0x4 - core index']
  #allocation1 [shape = 'u32[144,128]{1,0:T(1,128)}', space=vmem, size = 0x12000, scoped, tag = 'internal scratch']
  %s0 = inlined_call_operand.hbm [shape: f32[2,4,256], index: 0, kind: input, shape index: {}]
  %s1 = inlined_call_operand.vmem [shape: f32[1,4,1], index: 1, kind: input, shape index: {}]
  %s2 = inlined_call_operand.vmem [shape: f32[1,4,1], index: 2, kind: input, shape index: {}]
  %s3 = inlined_call_operand.hbm [shape: f32[2,4,256], index: 3, kind: output, shape index: {}]
  %s4 = sld [smem:[#allocation0]]
  $region49: #{tpu_custom_call.1} parent=0
    _
  %s6 = ssub.s32 1, %s4
  %s7 = scalar_select 0, %s6, %s4
  $region1: #{tpu_custom_call.1} parent=0
    #allocation2 [shape = 'u8[8192]{0}', space=vmem, size = 0x2000, scoped, tag = 'input window, operand 0']
    #allocation3 [shape = 's32[2]{0}', space=sflag, size = 0x8, scoped, tag = 'scoped memory for tpu_custom_call.1']
    #allocation4 [shape = 's32[2]{0}', space=sflag, size = 0x8, scoped, tag = 'scoped memory for tpu_custom_call.1']
    #allocation5 [shape = 'u8[8192]{0}', space=vmem, size = 0x2000, scoped, tag = 'output window, operand 0']
    %8 = vsyncpa [#allocation3], 0
    %s9 = scalar_lea.sflag [#allocation3], 1
    %10 = vsyncpa %s9, 0
    %11 = vsyncpa [#allocation4], 0
    %s12 = scalar_lea.sflag [#allocation4], 1
    %13 = vsyncpa %s12, 0
    loop: start=0, step=1, limit=4
    $region2: #{tpu_custom_call.1} parent=1 // loop_pre_header
      _
    $region3: #{tpu_custom_call.1} parent=1 // loop_header
      %s15 = sphi 0, %s19
      %p16 = scmp.ge.s32.totalorder %s15, 4
      %s22 = sphi 0, %s34
      %s23 = sphi 0, %s30
      %s24 = sphi 0, %s22
      %s25 = sphi 0, %s23
      %s26 = sphi 0, %s24
      %s27 = sphi 0, %s25
      %s39 = sphi 0, %s41
      %s42 = sphi 0, %s39
      %s43 = sphi 0, %s42
      %s59 = sphi 0, %s43
      %s63 = sphi 0, %s63
      %s65 = sphi 0, %s63
      %s66 = sphi 0, %s65
      %s80 = sphi 0, %s66
      %s84 = sphi 0, %s84
      %s86 = sphi 0, %s84
      %s87 = sphi 0, %s86
      %s101 = sphi 0, %s87
      %s109 = sphi 0, %s111
      %s112 = sphi 0, %s109
      %s113 = sphi 0, %s112
      %s129 = sphi 0, %s113
    $region4: #{tpu_custom_call.1} parent=1 // loop_header_branch
      %18 = sbr.rel (%p16) target = $region8
    $region5: #{tpu_custom_call.1} parent=1 // loop_body
      %s20 = ssub.s32 %s15, 1
      %s21 = ssub.s32 %s15, 2
      %s28 = sadd.s32 1, %s23
      %p29 = scmp.ge.s32.totalorder %s28, 1
      %s30 = scalar_select %p29, 0, %s28
      %s31 = sadd.s32 1, %s22
      %s32 = scalar_select %p29, %s31, %s22
      %p33 = scmp.ge.s32.totalorder %s32, 2
      %s34 = scalar_select %p33, 0, %s32
      %s35 = ssub.s32 %s22, %s34
      %s36 = ssub.s32 %s23, %s30
      %s37 = sor.u32 %s35, %s36
      %p38 = scmp.eq.s32.totalorder %s37, 0
      %s40 = sadd.s32 %s39, 1
      %s41 = scalar_select %p38, %s39, %s40
      %p44 = pneg %p38
      %p45 = scmp.eq.s32.totalorder %s15, 1
      %p46 = por %p44, %p45
      %p47 = scmp.ne.s32.totalorder %s39, %s42
      %p48 = scmp.eq.s32.totalorder %s15, 0
      %p49 = por %p47, %p48
      %p50 = scmp.ne.s32.totalorder %s39, %s42
      %p51 = scmp.eq.s32.totalorder %s20, 1
      %p52 = por %p50, %p51
      %p53 = scmp.ne.s32.totalorder %s42, %s43
      %p54 = scmp.eq.s32.totalorder %s20, 0
      %p55 = por %p53, %p54
      %p56 = scmp.ne.s32.totalorder %s42, %s43
      %p57 = scmp.eq.s32.totalorder %s21, 1
      %p58 = por %p56, %p57
      %p60 = scmp.ne.s32.totalorder %s43, %s59
      %p61 = scmp.eq.s32.totalorder %s21, 0
      %p62 = por %p60, %p61
      %s64 = sadd.s32 %s63, 1
      %p67 = scmp.eq.s32.totalorder %s15, 1
      %p68 = scmp.ne.s32.totalorder %s63, %s65
      %p69 = scmp.eq.s32.totalorder %s15, 0
      %p70 = por %p68, %p69
      %p71 = scmp.ne.s32.totalorder %s63, %s65
      %p72 = scmp.eq.s32.totalorder %s20, 1
      %p73 = por %p71, %p72
      %p74 = scmp.ne.s32.totalorder %s65, %s66
      %p75 = scmp.eq.s32.totalorder %s20, 0
      %p76 = por %p74, %p75
      %p77 = scmp.ne.s32.totalorder %s65, %s66
      %p78 = scmp.eq.s32.totalorder %s21, 1
      %p79 = por %p77, %p78
      %p81 = scmp.ne.s32.totalorder %s66, %s80
      %p82 = scmp.eq.s32.totalorder %s21, 0
      %p83 = por %p81, %p82
      %s85 = sadd.s32 %s84, 1
      %p88 = scmp.eq.s32.totalorder %s15, 1
      %p89 = scmp.ne.s32.totalorder %s84, %s86
      %p90 = scmp.eq.s32.totalorder %s15, 0
      %p91 = por %p89, %p90
      %p92 = scmp.ne.s32.totalorder %s84, %s86
      %p93 = scmp.eq.s32.totalorder %s20, 1
      %p94 = por %p92, %p93
      %p95 = scmp.ne.s32.totalorder %s86, %s87
      %p96 = scmp.eq.s32.totalorder %s20, 0
      %p97 = por %p95, %p96
      %p98 = scmp.ne.s32.totalorder %s86, %s87
      %p99 = scmp.eq.s32.totalorder %s21, 1
      %p100 = por %p98, %p99
      %p102 = scmp.ne.s32.totalorder %s87, %s101
      %p103 = scmp.eq.s32.totalorder %s21, 0
      %p104 = por %p102, %p103
      %s105 = ssub.s32 %s22, %s34
      %s106 = ssub.s32 %s23, %s30
      %s107 = sor.u32 %s105, %s106
      %p108 = scmp.eq.s32.totalorder %s107, 0
      %s110 = sadd.s32 %s109, 1
      %s111 = scalar_select %p108, %s109, %s110
      %p114 = pneg %p108
      %p115 = scmp.eq.s32.totalorder %s15, 1
      %p116 = por %p114, %p115
      %p117 = scmp.ne.s32.totalorder %s109, %s112
      %p118 = scmp.eq.s32.totalorder %s15, 0
      %p119 = por %p117, %p118
      %p120 = scmp.ne.s32.totalorder %s109, %s112
      %p121 = scmp.eq.s32.totalorder %s20, 1
      %p122 = por %p120, %p121
      %p123 = scmp.ne.s32.totalorder %s112, %s113
      %p124 = scmp.eq.s32.totalorder %s20, 0
      %p125 = por %p123, %p124
      %p126 = scmp.ne.s32.totalorder %s112, %s113
      %p127 = scmp.eq.s32.totalorder %s21, 1
      %p128 = por %p126, %p127
      %p130 = scmp.ne.s32.totalorder %s113, %s129
      %p131 = scmp.eq.s32.totalorder %s21, 0
      %p132 = por %p130, %p131
      %p133 = scmp.le.s32.totalorder 1, %s15
      %p134 = scmp.lt.s32.totalorder %s15, 3
      %p135 = pnand %p133, %p134
      %p136 = pneg %p135
      // Predicated region
      $region9: #{tpu_custom_call.1} parent=5 // pred_check
        _
      $region10: #{tpu_custom_call.1} parent=5 // pred_check_branch
        %138 = sbr.rel (%p135) target = $region12
      $region11: #{tpu_custom_call.1} parent=5 // pred_region
        %s139 = ssub.s32 %s15, 1
        // Predicated region
        $region13: #{tpu_custom_call.1} parent=11 // pred_check
          %p140 = pneg %p76
        $region14: #{tpu_custom_call.1} parent=11 // pred_check_branch
          %142 = sbr.rel (%p140) target = $region16
        $region15: #{tpu_custom_call.1} parent=11 // pred_region
          _
        $region16: #{tpu_custom_call.1} parent=11 // pred_fallthru
          _
        // Predicated region
        $region17: #{tpu_custom_call.1} parent=11 // pred_check
          %p143 = pneg %p97
        $region18: #{tpu_custom_call.1} parent=11 // pred_check_branch
          %145 = sbr.rel (%p143) target = $region20
        $region19: #{tpu_custom_call.1} parent=11 // pred_region
          _
        $region20: #{tpu_custom_call.1} parent=11 // pred_fallthru
          _
      $region12: #{tpu_custom_call.1} parent=5 // pred_fallthru
        _
      %p146 = scmp.lt.s32.totalorder %s15, 2
      // Predicated region
      $region21: #{tpu_custom_call.1} parent=5 // pred_check
        %p147 = pneg %p146
      $region22: #{tpu_custom_call.1} parent=5 // pred_check_branch
        %149 = sbr.rel (%p147) target = $region24
      $region23: #{tpu_custom_call.1} parent=5 // pred_region
        // Predicated region
        $region25: #{tpu_custom_call.1} parent=23 // pred_check
          %p150 = pneg %p49
        $region26: #{tpu_custom_call.1} parent=23 // pred_check_branch
          %152 = sbr.rel (%p150) target = $region28
        $region27: #{tpu_custom_call.1} parent=23 // pred_region
          %s153 = sand.u32 %s39, 1
          %s154 = scalar_lea.sflag [#allocation3], %s153
          %s155 = sand.u32 %s39, 1
          %s156 = smul.addr %s155, 8
          %s157 = scalar_lea.vmem [#allocation2], %s156
          %s158 = smul.u32 2, %s23
          %s160 = ssub.s32 128, 128
          %161 = vsyncadd %s154, %s160
          %s162 = smul.addr %s22, 2
          %s163 = sadd.s32 %s158, %s162
          %s164 = smul.addr %s163, 64
          %s165 = scalar_lea.hbm %s0, %s164
          %s167 = sshll.u32 %s157, 4
          %s168 = int_to_ptr.vmem [resolvable:$true] %s167
          %170 = dma.hbm_to_vmem [thread:$0]  %s165, 128, %s168, %s154
        $region28: #{tpu_custom_call.1} parent=23 // pred_fallthru
          _
      $region24: #{tpu_custom_call.1} parent=5 // pred_fallthru
        _
      %p171 = scmp.le.s32.totalorder 1, %s15
      %p172 = scmp.lt.s32.totalorder %s15, 3
      %p173 = pnand %p171, %p172
      %p174 = pneg %p173
      // Predicated region
      $region29: #{tpu_custom_call.1} parent=5 // pred_check
        _
      $region30: #{tpu_custom_call.1} parent=5 // pred_check_branch
        %176 = sbr.rel (%p173) target = $region32
      $region31: #{tpu_custom_call.1} parent=5 // pred_region
        %s177 = ssub.s32 %s15, 1
        %s178 = sand.u32 %s42, 1
        %s179 = scalar_lea.sflag [#allocation3], %s178
        %s180 = sand.u32 %s42, 1
        %s181 = smul.addr %s180, 8
        %s182 = scalar_lea.vmem [#allocation2], %s181
        // Predicated region
        $region33: #{tpu_custom_call.1} parent=31 // pred_check
          %p183 = pneg %p55
        $region34: #{tpu_custom_call.1} parent=31 // pred_check_branch
          %185 = sbr.rel (%p183) target = $region36
        $region35: #{tpu_custom_call.1} parent=31 // pred_region
          %186 = dma.done %s179, 128
        $region36: #{tpu_custom_call.1} parent=31 // pred_fallthru
          _
        %s187 = sand.u32 %s42, 1
        %s188 = scalar_lea.sflag [#allocation3], %s187
        %s189 = sand.u32 %s42, 1
        %s190 = smul.addr %s189, 8
        %s191 = scalar_lea.vmem [#allocation2], %s190
        %p192 = pneg %p55
        %p193 = pneg %p52
        %p194 = pneg %p76
        %p195 = pneg %p73
        %p196 = pneg %p97
        %p197 = pneg %p94
        %p198 = pneg %p125
        %p199 = pneg %p122
        %s200 = sand.u32 %s112, 1
        %s201 = scalar_lea.sflag [#allocation4], %s200
        %s202 = sand.u32 %s112, 1
        %s203 = smul.addr %s202, 8
        %s204 = scalar_lea.vmem [#allocation5], %s203
        %s205 = smul.u32 2, %s25
        %s206 = smul.u32 2, %s25
        %v207 = vld [vmem:[%s182] sm:$0xff]
        %v208 = vld [vmem:[%s1] sm:$0xf]
        %v209 = vld [vmem:[%s2] sm:$0xf]
        %v211 = vcombine.high %v207, %v207
        %vm213 = vcmask 1043456
        %v214 = vsel %vm213, %v207, 0.0
        %v215 = vrot.slane %v214, 4
        %v216 = vadd.f32 %v214, %v215
        %v217 = vrot.slane %v216, 2
        %v218 = vadd.f32 %v216, %v217
        %v219 = vrot.slane %v218, 1
        %v220 = vadd.f32 %v218, %v219
        %v221 = vsel %vm213, %v211, 0.0
        %v222 = vrot.slane %v221, 4
        %v223 = vadd.f32 %v221, %v222
        %v224 = vrot.slane %v223, 2
        %v225 = vadd.f32 %v223, %v224
        %v226 = vrot.slane %v225, 1
        %v227 = vadd.f32 %v225, %v226
        %v228 = vrcp.pop 4.0
        %v229 = vmul.f32 %v220, %v228
        %v230 = vmul.f32 %v227, %v228
        %v231 = vmul.f32 %v207, %v207
        %v233 = vcombine.high %v231, %v231
        %v235 = vsel %vm213, %v231, 0.0
        %v236 = vrot.slane %v235, 4
        %v237 = vadd.f32 %v235, %v236
        %v238 = vrot.slane %v237, 2
        %v239 = vadd.f32 %v237, %v238
        %v240 = vrot.slane %v239, 1
        %v241 = vadd.f32 %v239, %v240
        %v242 = vsel %vm213, %v233, 0.0
        %v243 = vrot.slane %v242, 4
        %v244 = vadd.f32 %v242, %v243
        %v245 = vrot.slane %v244, 2
        %v246 = vadd.f32 %v244, %v245
        %v247 = vrot.slane %v246, 1
        %v248 = vadd.f32 %v246, %v247
        %v249 = vmul.f32 %v241, %v228
        %v250 = vmul.f32 %v248, %v228
        %v251 = vmul.f32 %v229, %v229
        %v252 = vmul.f32 %v230, %v230
        %v253 = vsub.f32 %v249, %v251
        %v254 = vsub.f32 %v250, %v252
        %v255 = vmax.f32 %v253, 0.0
        %v256 = vmax.f32 %v254, 0.0
        %v257 = vadd.f32 %v255, 1e-06
        %v258 = vadd.f32 %v256, 1e-06
        %v259 = vrsqrt.pop %v257
        %v260 = vrsqrt.pop %v258
        %v263 = vcombine.low %v229, %v230
        %v265 = vsub.f32 %v207, %v263
        %v268 = vcombine.low %v259, %v260
        %v270 = vmul.f32 %v265, %v268
        %272 = vset.pattern.permute.xlu0 0
        %273 = vperm.xlu0 %272, %v208
        %v274 = vpop.permute.xlu0 %273
        %v276 = vunpack.c.l.s4 839922192
        %v277 = vunpack.c.0.s8 %v276
        %v278 = vlaneseq
        %v279 = vshrl.u32 %v278, 7
        %v280 = vsub.s32 %v277, %v279
        %v281 = vrot.slane %v274, %v280
        %v283 = vmul.f32 %v270, %v281
        %285 = vset.pattern.permute.xlu0 0
        %286 = vperm.xlu0 %285, %v209
        %v287 = vpop.permute.xlu0 %286
        %v289 = vunpack.c.l.s4 839922192
        %v290 = vunpack.c.0.s8 %v289
        %v291 = vlaneseq
        %v292 = vshrl.u32 %v291, 7
        %v293 = vsub.s32 %v290, %v292
        %v294 = vrot.slane %v287, %v293
        %v296 = vadd.f32 %v283, %v294
        %297 = vst [vmem:[%s204] sm:$0xff] %v296
        %s298 = sand.u32 %s112, 1
        %s299 = scalar_lea.sflag [#allocation4], %s298
        %s300 = sand.u32 %s112, 1
        %s301 = smul.addr %s300, 8
        %s302 = scalar_lea.vmem [#allocation5], %s301
        // Predicated region
        $region37: #{tpu_custom_call.1} parent=31 // pred_check
          %p303 = pneg %p122
        $region38: #{tpu_custom_call.1} parent=31 // pred_check_branch
          %305 = sbr.rel (%p303) target = $region40
        $region39: #{tpu_custom_call.1} parent=31 // pred_region
          %s306 = smul.u32 2, %s25
          %s308 = ssub.s32 128, 128
          %309 = vsyncadd %s299, %s308
          %s310 = smul.addr %s24, 2
          %s311 = sadd.s32 %s306, %s310
          %s312 = smul.addr %s311, 64
          %s313 = scalar_lea.hbm %s3, %s312
          %s315 = sshll.u32 %s302, 4
          %s316 = int_to_ptr.vmem [resolvable:$true] %s315
          %318 = dma.vmem_to_hbm [thread:$0]  %s316, 128, %s313, %s299
        $region40: #{tpu_custom_call.1} parent=31 // pred_fallthru
          _
      $region32: #{tpu_custom_call.1} parent=5 // pred_fallthru
        _
      %p319 = scmp.le.s32.totalorder 2, %s15
      // Predicated region
      $region41: #{tpu_custom_call.1} parent=5 // pred_check
        %p320 = pneg %p319
      $region42: #{tpu_custom_call.1} parent=5 // pred_check_branch
        %322 = sbr.rel (%p320) target = $region44
      $region43: #{tpu_custom_call.1} parent=5 // pred_region
        %s323 = ssub.s32 %s15, 2
        // Predicated region
        $region45: #{tpu_custom_call.1} parent=43 // pred_check
          %p324 = pneg %p128
        $region46: #{tpu_custom_call.1} parent=43 // pred_check_branch
          %326 = sbr.rel (%p324) target = $region48
        $region47: #{tpu_custom_call.1} parent=43 // pred_region
          %s327 = sand.u32 %s113, 1
          %s328 = scalar_lea.sflag [#allocation4], %s327
          %s329 = sand.u32 %s113, 1
          %s330 = smul.addr %s329, 8
          %s331 = scalar_lea.vmem [#allocation5], %s330
          %332 = dma.done %s328, 128
        $region48: #{tpu_custom_call.1} parent=43 // pred_fallthru
          _
      $region44: #{tpu_custom_call.1} parent=5 // pred_fallthru
        _
    $region6: #{tpu_custom_call.1} parent=1 // loop_footer
      %s19 = sadd.s32 1, %s15
    $region7: #{tpu_custom_call.1} parent=1 // loop_footer_branch
      %14 = sbr.rel target = $region3
    $region8: #{tpu_custom_call.1} parent=1 // loop_exit
      _
    %333 = vsyncpa [#allocation3], 1
    %s334 = scalar_lea.sflag [#allocation3], 1
    %335 = vsyncpa %s334, 1
    %336 = vsyncpa [#allocation4], 1
    %s337 = scalar_lea.sflag [#allocation4], 1
    %338 = vsyncpa %s337, 1

</llo_original>
